<compile_context>
chip_gen: v7x
topology: tpu7x:2x2x1
jax: 0.10.0
libtpu: 0.0.40
codegen_flags: <defaults>
</compile_context>

<pallas_src>
import math

import jax
import jax.numpy as jnp
from jax.experimental import pallas as pl
from jax.experimental.pallas import tpu as pltpu

_LANE = 128


def _make_kernel(bb, fuse_residual):
    """Kernel over one (bb, tr, 128) tile; per-sample scale read from SMEM."""
    if fuse_residual:
        def kernel(scale_ref, x_ref, res_ref, o_ref):
            b0 = pl.program_id(0) * bb
            for i in range(bb):                       # bb is small & static
                s = scale_ref[b0 + i]                 # f32 scalar from SMEM
                o_ref[i] = (res_ref[i] + x_ref[i] * s).astype(o_ref.dtype)
    else:
        def kernel(scale_ref, x_ref, o_ref):
            b0 = pl.program_id(0) * bb
            for i in range(bb):
                s = scale_ref[b0 + i]
                o_ref[i] = (x_ref[i] * s).astype(o_ref.dtype)
    return kernel


def segformer_drop_path(hidden_states, drop_prob, training, key, residual=None):
    """Forward of SegformerDropPath.

    hidden_states: (B, ...) any rank >= 2.
    residual: optional tensor of identical shape; when given, the residual add
              (`residual + drop_path(x)`) is fused into the same kernel.
    """
    if drop_prob is None or drop_prob == 0.0 or not training:
        return hidden_states if residual is None else residual + hidden_states

    keep_prob = 1.0 - drop_prob
    orig_shape = hidden_states.shape
    B = orig_shape[0]
    total = math.prod(orig_shape[1:])

    # Per-sample keep/drop decision, pre-scaled: 0.0 or 1/keep_prob (f32).
    # (x * (1/keep_prob) vs PyTorch's x / keep_prob: <= 1 ulp difference.)
    u = jax.random.uniform(key, (B,), dtype=jnp.float32)
    scale = jnp.floor(jnp.float32(keep_prob) + u) * jnp.float32(1.0 / keep_prob)

    # Lane-dense layout: flatten each sample into rows of 128 lanes.
    rows = -(-total // _LANE)
    padded = rows * _LANE
    if padded == total:                       # common case: free reshape only
        x_rows = hidden_states.reshape(B, rows, _LANE)
        res_rows = None if residual is None else residual.reshape(B, rows, _LANE)
    else:                                     # rare ragged case: pad + slice
        pad = ((0, 0), (0, padded - total))
        x_rows = jnp.pad(hidden_states.reshape(B, total), pad).reshape(B, rows, _LANE)
        res_rows = (None if residual is None else
                    jnp.pad(residual.reshape(B, total), pad).reshape(B, rows, _LANE))

    # Tile sizing: per-stream block bytes from a 12 MiB double-buffered budget
    # (safe under every generation's default scoped VMEM, incl. v5e's 16 MiB).
    itemsize = jnp.dtype(hidden_states.dtype).itemsize
    n_streams = 3 if res_rows is not None else 2        # x, out, (residual)
    blk_bytes = (12 * 1024 * 1024) // (2 * n_streams)   # per buffer
    target_rows = max(8, blk_bytes // (_LANE * itemsize))

    if rows > target_rows:
        # Large samples: tile rows (>= 2 row blocks), one sample per step.
        bb = 1
        tr = (target_rows // 8) * 8
    else:
        # Small samples: whole sample per step, pack several samples per step.
        tr = rows
        bb_cap = max(1, min(B, target_rows // max(rows, 1), 16))
        bb = max(d for d in range(1, bb_cap + 1) if B % d == 0)  # bb | B
    num_b_blocks = B // bb
    num_r_blocks = -(-rows // tr)   # trailing partial block is boundary-masked

    data_spec = pl.BlockSpec((bb, tr, _LANE), lambda b, r: (b, r, 0))
    in_specs = [pl.BlockSpec(memory_space=pltpu.MemorySpace.SMEM), data_spec]
    args = [scale, x_rows]
    if res_rows is not None:
        in_specs.append(data_spec)
        args.append(res_rows)

    out_rows = pl.pallas_call(
        _make_kernel(bb, res_rows is not None),
        out_shape=jax.ShapeDtypeStruct((B, rows, _LANE), hidden_states.dtype),
        grid=(num_b_blocks, num_r_blocks),
        in_specs=in_specs,
        out_specs=data_spec,
        input_output_aliases={1: 0},                 # donate x's buffer
        compiler_params=pltpu.CompilerParams(
            dimension_semantics=("parallel", "parallel")),
    )(*args)

    if padded != total:
        return out_rows.reshape(B, padded)[:, :total].reshape(orig_shape)
    return out_rows.reshape(orig_shape)


if __name__ == "__main__":
    root = jax.random.PRNGKey(0)
    k_x, k_res, k_mask, k_x2, k_x3 = jax.random.split(root, 5)

    drop_prob = 0.3
    keep_prob = 1.0 - drop_prob

    # 1) Main shape (B, seq, C) = (2, 8, 32), training path.
    B, N, C = 2, 8, 32
    x = jax.random.normal(k_x, (B, N, C), dtype=jnp.float32)
    out = jax.block_until_ready(segformer_drop_path(x, drop_prob, True, k_mask))
    u = jax.random.uniform(k_mask, (B,), dtype=jnp.float32)
    mask = jnp.floor(keep_prob + u).reshape(B, 1, 1)
    ref = (x / keep_prob) * mask
    assert jnp.allclose(out, ref, atol=1e-5, rtol=1e-6), "plain drop_path mismatch"

    # 2) Fused residual path (Segformer's real usage).
    res = jax.random.normal(k_res, (B, N, C), dtype=jnp.float32)
    out_f = jax.block_until_ready(
        segformer_drop_path(x, drop_prob, True, k_mask, residual=res))
    assert jnp.allclose(out_f, res + ref, atol=1e-5, rtol=1e-6), "fused residual mismatch"

    # 3) Ragged channel case (total % 128 != 0 -> pad path).
    x2 = jax.random.normal(k_x2, (2, 3, 160), dtype=jnp.float32)
    out2 = jax.block_until_ready(segformer_drop_path(x2, drop_prob, True, k_mask))
    u2 = jax.random.uniform(k_mask, (2,), dtype=jnp.float32)
    ref2 = (x2 / keep_prob) * jnp.floor(keep_prob + u2).reshape(2, 1, 1)
    assert jnp.allclose(out2, ref2, atol=1e-5, rtol=1e-6), "ragged case mismatch"

    # 4) Large single-sample case -> multiple row blocks (>= 2 grid steps).
    x3 = jax.random.normal(k_x3, (1, 8192, 128), dtype=jnp.float32)
    out3 = jax.block_until_ready(segformer_drop_path(x3, drop_prob, True, k_mask))
    u3 = jax.random.uniform(k_mask, (1,), dtype=jnp.float32)
    ref3 = (x3 / keep_prob) * jnp.floor(keep_prob + u3).reshape(1, 1, 1)
    assert jnp.allclose(out3, ref3, atol=1e-5, rtol=1e-6), "multi-block case mismatch"

    # 5) Eval path: identity.
    out_eval = jax.block_until_ready(segformer_drop_path(x, drop_prob, False, k_mask))
    assert jnp.array_equal(out_eval, x)

    print("KERNEL_OK")
</pallas_src>

<mosaic_0001>
module attributes {stable_mosaic.version = 11 : i64} {
  func.func @kernel(%arg0: i32, %arg1: i32, %arg2: memref<2xf32, #tpu.memory_space<smem>>, %arg3: memref<2x2x128xf32, #tpu.memory_space<vmem>>, %arg4: memref<2x2x128xf32, #tpu.memory_space<vmem>>) attributes {dimension_semantics = [#tpu.dimension_semantics<parallel>, #tpu.dimension_semantics<parallel>], iteration_bounds = array<i64: 1, 1>, scalar_prefetch = 0 : i64, scratch_operands = 0 : i64, tpu.core_type = #tpu.core_type<tc>, window_params = [{transform_indices = @transform_0, window_bounds = array<i64: 2>}, {transform_indices = @transform_1, window_bounds = array<i64: 2, 2, 128>}, {transform_indices = @transform_2, window_bounds = array<i64: 2, 2, 128>}]} {
    %c2_i32 = arith.constant 2 : i32
    %0 = arith.muli %arg0, %c2_i32 : i32
    %c0_i32 = arith.constant 0 : i32
    %1 = arith.addi %0, %c0_i32 : i32
    %2 = arith.index_cast %1 : i32 to index
    %3 = memref.load %arg2[%2] : memref<2xf32, #tpu.memory_space<smem>>
    %c0 = arith.constant 0 : index
    %c0_0 = arith.constant 0 : index
    %c0_1 = arith.constant 0 : index
    %4 = vector.load %arg3[%c0, %c0_0, %c0_1] : memref<2x2x128xf32, #tpu.memory_space<vmem>>, vector<1x2x128xf32>
    %5 = vector.shape_cast %4 : vector<1x2x128xf32> to vector<2x128xf32>
    %6 = vector.broadcast %3 : f32 to vector<2x128xf32>
    %7 = arith.mulf %5, %6 : vector<2x128xf32>
    %c0_2 = arith.constant 0 : index
    %c0_3 = arith.constant 0 : index
    %c0_4 = arith.constant 0 : index
    %8 = vector.load %arg4[%c0_2, %c0_3, %c0_4] : memref<2x2x128xf32, #tpu.memory_space<vmem>>, vector<1x2x128xf32>
    %9 = vector.shape_cast %8 : vector<1x2x128xf32> to vector<2x128xf32>
    %10 = vector.shape_cast %7 : vector<2x128xf32> to vector<1x2x128xf32>
    tpu.vector_store %arg4[%c0_2, %c0_3, %c0_4], %10 {strides = array<i32>} : memref<2x2x128xf32, #tpu.memory_space<vmem>>, vector<1x2x128xf32>,
    %c1_i32 = arith.constant 1 : i32
    %11 = arith.addi %0, %c1_i32 : i32
    %12 = arith.index_cast %11 : i32 to index
    %13 = memref.load %arg2[%12] : memref<2xf32, #tpu.memory_space<smem>>
    %c1 = arith.constant 1 : index
    %c0_5 = arith.constant 0 : index
    %c0_6 = arith.constant 0 : index
    %14 = vector.load %arg3[%c1, %c0_5, %c0_6] : memref<2x2x128xf32, #tpu.memory_space<vmem>>, vector<1x2x128xf32>
    %15 = vector.shape_cast %14 : vector<1x2x128xf32> to vector<2x128xf32>
    %16 = vector.broadcast %13 : f32 to vector<2x128xf32>
    %17 = arith.mulf %15, %16 : vector<2x128xf32>
    %c1_7 = arith.constant 1 : index
    %c0_8 = arith.constant 0 : index
    %c0_9 = arith.constant 0 : index
    %18 = vector.load %arg4[%c1_7, %c0_8, %c0_9] : memref<2x2x128xf32, #tpu.memory_space<vmem>>, vector<1x2x128xf32>
    %19 = vector.shape_cast %18 : vector<1x2x128xf32> to vector<2x128xf32>
    %20 = vector.shape_cast %17 : vector<2x128xf32> to vector<1x2x128xf32>
    tpu.vector_store %arg4[%c1_7, %c0_8, %c0_9], %20 {strides = array<i32>} : memref<2x2x128xf32, #tpu.memory_space<vmem>>, vector<1x2x128xf32>,
    return
  }
  func.func @transform_0(%arg0: i32, %arg1: i32) -> i32 {
    %c0_i32 = arith.constant 0 : i32
    %c0_i32_0 = arith.constant 0 : i32
    return %c0_i32 : i32
  }
  func.func @transform_1(%arg0: i32, %arg1: i32) -> (i32, i32, i32) {
    %c0_i32 = arith.constant 0 : i32
    %c0_i32_0 = arith.constant 0 : i32
    return %arg0, %arg1, %c0_i32 : i32, i32, i32
  }
  func.func @transform_2(%arg0: i32, %arg1: i32) -> (i32, i32, i32) {
    %c0_i32 = arith.constant 0 : i32
    %c0_i32_0 = arith.constant 0 : i32
    return %arg0, %arg1, %c0_i32 : i32, i32, i32
  }
}

</mosaic_0001>

<llo_original>
// kernel: tpu_custom_call.1
$region0: #{tpu_custom_call.1}
  #allocation0 [shape = 'u32[]', space=smem, size = 0x4, offset = 0x4, fixed_abs, tag = 'smem constant byte address 0x4 - core index']
  #allocation1 [shape = 'u32[144,128]{1,0:T(1,128)}', space=vmem, size = 0x12000, scoped, tag = 'internal scratch']
  %s0 = inlined_call_operand.vmem [shape: f32[2], index: 0, kind: input, shape index: {}]
  %s1 = inlined_call_operand.hbm [shape: f32[2,2,128], index: 1, kind: input, shape index: {}, may-alias: {1,2}]
  %s2 = inlined_call_operand.hbm [shape: f32[2,2,128], index: 2, kind: output, shape index: {}, may-alias: {1,2}]
  %s3 = sld [smem:[#allocation0]]
  $region26: #{tpu_custom_call.1} parent=0
    _
  %s5 = ssub.s32 1, %s3
  %s6 = scalar_select 0, %s5, %s3
  $region1: #{tpu_custom_call.1} parent=0
    #allocation2 [shape = 'u8[512]{0}', space=smem, size = 0x200, scoped, tag = 'input window, operand 0, single buffered']
    #allocation3 [shape = 's32[1]{0}', space=sflag, size = 0x4, scoped, tag = 'scoped memory for tpu_custom_call.1']
    #allocation4 [shape = 's32[1]{0}', space=sflag, size = 0x4, scoped, tag = 'scoped memory for tpu_custom_call.1']
    #allocation5 [shape = 's32[1]{0}', space=sflag, size = 0x4, scoped, tag = 'scoped memory for tpu_custom_call.1']
    #allocation6 [shape = 'u8[2048]{0}', space=vmem, size = 0x800, scoped, tag = 'input window, operand 1, single buffered']
    #allocation7 [shape = 'u8[2048]{0}', space=vmem, size = 0x800, scoped, tag = 'output window, operand 0, single buffered']
    %7 = vsyncpa [#allocation5], 0
    %8 = vsyncpa [#allocation3], 0
    %9 = vsyncpa [#allocation4], 0
    // Predicated region
    $region2: #{tpu_custom_call.1} parent=1 // pred_check
      _
    $region3: #{tpu_custom_call.1} parent=1 // pred_check_branch
      %11 = sbr.rel (0) target = $region5
    $region4: #{tpu_custom_call.1} parent=1 // pred_region
      %s13 = ssub.s32 16, 16
      %14 = vsyncadd [#allocation5], %s13
      %s16 = sshll.u32 %s0, 4
      %s17 = int_to_ptr.vmem [resolvable:$true] %s16
      %19 = dma.vmem_to_smem %s17, 16, [#allocation2], [#allocation5]
    $region5: #{tpu_custom_call.1} parent=1 // pred_fallthru
      _
    // Predicated region
    $region6: #{tpu_custom_call.1} parent=1 // pred_check
      _
    $region7: #{tpu_custom_call.1} parent=1 // pred_check_branch
      %21 = sbr.rel (0) target = $region9
    $region8: #{tpu_custom_call.1} parent=1 // pred_region
      %s23 = ssub.s32 64, 64
      %24 = vsyncadd [#allocation3], %s23
      %s25 = sshll.u32 [#allocation6], 4
      %s26 = int_to_ptr.vmem [resolvable:$true] %s25
      %31 = dma.hbm_to_vmem [thread:$0]  %s1, 64, %s26, [#allocation3], 32, 32, 2
    $region9: #{tpu_custom_call.1} parent=1 // pred_fallthru
      _
    // Predicated region
    $region10: #{tpu_custom_call.1} parent=1 // pred_check
      _
    $region11: #{tpu_custom_call.1} parent=1 // pred_check_branch
      %33 = sbr.rel (0) target = $region13
    $region12: #{tpu_custom_call.1} parent=1 // pred_region
      %34 = dma.done [#allocation5], 16
    $region13: #{tpu_custom_call.1} parent=1 // pred_fallthru
      _
    // Predicated region
    $region14: #{tpu_custom_call.1} parent=1 // pred_check
      _
    $region15: #{tpu_custom_call.1} parent=1 // pred_check_branch
      %36 = sbr.rel (0) target = $region17
    $region16: #{tpu_custom_call.1} parent=1 // pred_region
      %37 = dma.done [#allocation3], 64
    $region17: #{tpu_custom_call.1} parent=1 // pred_fallthru
      _
    %38 = sfence
    %s39 = smul.u32 0, 2
    %s40 = sld [smem:[#allocation2 + %s39]]
    %v41 = vld [vmem:[#allocation6] sm:$0x3]
    %v42 = vstv %s40
    %v43 = vmul.f32 %v41, %v42
    %44 = vst [vmem:[#allocation7] sm:$0x3] %v43
    %s45 = sadd.s32 %s39, 1
    %s46 = sld [smem:[#allocation2 + %s45]]
    %s47 = scalar_lea.vmem [#allocation6], 2
    %v48 = vld [vmem:[%s47] sm:$0x3]
    %v49 = vstv %s46
    %v50 = vmul.f32 %v48, %v49
    %s51 = scalar_lea.vmem [#allocation7], 2
    %52 = vst [vmem:[%s51] sm:$0x3] %v50
    // Predicated region
    $region18: #{tpu_custom_call.1} parent=1 // pred_check
      _
    $region19: #{tpu_custom_call.1} parent=1 // pred_check_branch
      %54 = sbr.rel (0) target = $region21
    $region20: #{tpu_custom_call.1} parent=1 // pred_region
      %s56 = ssub.s32 64, 64
      %57 = vsyncadd [#allocation4], %s56
      %s58 = sshll.u32 [#allocation7], 4
      %s59 = int_to_ptr.vmem [resolvable:$true] %s58
      %64 = dma.vmem_to_hbm [thread:$0]  %s59, 64, %s2, [#allocation4], 32, 32, 2
    $region21: #{tpu_custom_call.1} parent=1 // pred_fallthru
      _
    // Predicated region
    $region22: #{tpu_custom_call.1} parent=1 // pred_check
      _
    $region23: #{tpu_custom_call.1} parent=1 // pred_check_branch
      %66 = sbr.rel (0) target = $region25
    $region24: #{tpu_custom_call.1} parent=1 // pred_region
      %67 = dma.done [#allocation4], 64
    $region25: #{tpu_custom_call.1} parent=1 // pred_fallthru
      _
    %68 = vsyncpa [#allocation3], 1
    %69 = vsyncpa [#allocation4], 1
    %70 = vsyncpa [#allocation5], 1

</llo_original>
